<compile_context>
chip_gen: v6e
topology: v6e:2x2x1
jax: 0.10.0
libtpu: 0.0.40
codegen_flags: <defaults>
</compile_context>

<pallas_src>
import jax
import jax.numpy as jnp
from jax import lax
from jax.experimental import pallas as pl
from jax.experimental.pallas import tpu as pltpu


_LANES = 128
_CHUNK_ROWS = 512        # strip-mine granularity inside a tile (rows of G samples)
_MAX_TILE_ROWS = 8192    # 8192 rows * 32 samples/row = 262144 samples per grid step


def _round_up(x, m):
    return (x + m - 1) // m * m


def _vmem_capacity_bytes():
    try:
        info = pltpu.get_tpu_info()
        cap = int(getattr(info, "vmem_capacity_bytes", 0))
        if cap > 0:
            return cap
    except Exception:
        pass
    return 64 << 20      # conservative default (v7x per-TensorCore VMEM)


def _make_kernel(chunk_rows, n_chunks):
    """Kernel over one (tile_rows, G*in) x-block -> (tile_rows, G*classes) out-block."""

    def compute(xc, w1_ref, b1_ref, w2_ref, b2_ref):
        # In-kernel cast mirrors X.float() without an extra HBM pass.
        h = jnp.dot(xc.astype(jnp.float32), w1_ref[...],
                    preferred_element_type=jnp.float32)
        h = jnp.maximum(h + b1_ref[...], 0.0)                     # fc1 + ReLU
        z = jnp.dot(h, w2_ref[...], preferred_element_type=jnp.float32)
        return z + b2_ref[...]                                    # fc2

    def kernel(x_ref, w1_ref, b1_ref, w2_ref, b2_ref, o_ref):
        if n_chunks == 1:
            o_ref[...] = compute(x_ref[...], w1_ref, b1_ref, w2_ref,
                                 b2_ref).astype(o_ref.dtype)
        else:
            def body(c, carry):
                r0 = pl.multiple_of(c * chunk_rows, chunk_rows)
                xc = x_ref[pl.ds(r0, chunk_rows), :]
                o_ref[pl.ds(r0, chunk_rows), :] = compute(
                    xc, w1_ref, b1_ref, w2_ref, b2_ref).astype(o_ref.dtype)
                return carry
            lax.fori_loop(0, n_chunks, body, 0)

    return kernel


def ann_model_forward(x, w1, b1, w2, b2):
    """Forward pass of ANN_model:  relu(x @ w1^T + b1) @ w2^T + b2.

    x : (B, input_dim)   any float/int dtype (cast to f32 in-kernel like X.float())
    w1: (hidden, input_dim),  b1: (hidden,)        -- PyTorch fc1 parameter layout
    w2: (num_classes, hidden), b2: (num_classes,)  -- PyTorch fc2 parameter layout
    returns (B, num_classes) float32
    """
    B, input_dim = x.shape
    hidden = w1.shape[0]
    num_classes = w2.shape[0]

    # Pallas TPU refs don't take f64; keep bf16/f16 narrow, widen anything else.
    if x.dtype not in (jnp.float32, jnp.bfloat16, jnp.float16):
        x = x.astype(jnp.float32)

    # --- fuse G samples per lane group ---------------------------------------
    # G*input_dim == 128 for input_dim=4 -> fully lane-dense x blocks.
    G = max(1, _LANES // input_dim)
    lx, lh, lo = G * input_dim, G * hidden, G * num_classes

    w1 = w1.astype(jnp.float32)
    w2 = w2.astype(jnp.float32)
    eye = jnp.eye(G, dtype=jnp.float32)
    # Block-diagonal "G samples at a time" weights: kron(I_G, W^T).
    # (In a real deployment these tiny fused weights would be precomputed once.)
    w1_big = jnp.kron(eye, w1.T)                                   # (lx, lh)
    w2_big = jnp.kron(eye, w2.T)                                   # (lh, lo)
    b1_big = jnp.tile(b1.astype(jnp.float32), G).reshape(1, lh)    # (1, lh)
    b2_big = jnp.tile(b2.astype(jnp.float32), G).reshape(1, lo)    # (1, lo)

    # --- free row-major reshape: (B, in) -> (rows, G*in) ----------------------
    B_pad = _round_up(B, G)
    if B_pad != B:
        # rare ragged-batch path: one small pad copy; sliced back after the call
        x = jnp.pad(x, ((0, B_pad - B), (0, 0)))
    rows = B_pad // G
    x2 = x.reshape(rows, lx)

    # --- tile / VMEM budgeting (per-generation) -------------------------------
    vmem_cap = _vmem_capacity_bytes()
    x_row_bytes = _round_up(lx, _LANES) * x.dtype.itemsize
    o_row_bytes = _round_up(lo, _LANES) * 4
    bytes_per_row = 2 * (x_row_bytes + o_row_bytes)     # double-buffered in + out blocks
    fixed_bytes = 8 << 20                               # fused weights + temps + scratch
    budget = max(0, int(0.45 * vmem_cap) - fixed_bytes)
    max_rows_by_vmem = max(_CHUNK_ROWS, budget // max(1, bytes_per_row))

    if rows <= _CHUNK_ROWS:
        tile_rows = rows                                 # single grid step, single strip
        chunk_rows, n_chunks = rows, 1
    else:
        target = min(rows, _MAX_TILE_ROWS, max_rows_by_vmem)
        # keep >= 2 grid steps so the v7x megacore can split the batch
        target = min(target, _round_up(pl.cdiv(rows, 2), _CHUNK_ROWS))
        tile_rows = _round_up(target, _CHUNK_ROWS)
        chunk_rows, n_chunks = _CHUNK_ROWS, tile_rows // _CHUNK_ROWS

    grid = (pl.cdiv(rows, tile_rows),)

    def resident(shape):          # full array, same block every step -> stays in VMEM
        return pl.BlockSpec(shape, lambda i: (0, 0))

    cost = pl.CostEstimate(
        flops=2 * B_pad * (input_dim * hidden + hidden * num_classes),
        transcendentals=0,
        bytes_accessed=B_pad * (input_dim * x.dtype.itemsize + num_classes * 4)
        + 4 * (lx * lh + lh * lo + lh + lo),
    )

    out2 = pl.pallas_call(
        _make_kernel(chunk_rows, n_chunks),
        out_shape=jax.ShapeDtypeStruct((rows, lo), jnp.float32),
        grid_spec=pltpu.PrefetchScalarGridSpec(
            num_scalar_prefetch=0,
            grid=grid,
            in_specs=[
                pl.BlockSpec((tile_rows, lx), lambda i: (i, 0)),   # x tiles (pipelined)
                resident((lx, lh)),                                # fused fc1 weight
                resident((1, lh)),                                 # fused fc1 bias
                resident((lh, lo)),                                # fused fc2 weight
                resident((1, lo)),                                 # fused fc2 bias
            ],
            out_specs=pl.BlockSpec((tile_rows, lo), lambda i: (i, 0)),
        ),
        compiler_params=pltpu.CompilerParams(
            dimension_semantics=("parallel",),                     # v7x megacore split
            vmem_limit_bytes=min(int(0.85 * vmem_cap), 128 << 20),
        ),
        cost_estimate=cost,
    )(x2, w1_big, b1_big, w2_big, b2_big)

    out = out2.reshape(B_pad, num_classes)                         # free row-major reshape
    return out if B_pad == B else out[:B]


def _reference(x, w1, b1, w2, b2):
    # Pure-JAX mirror of the PyTorch forward, at full f32 precision.
    x = x.astype(jnp.float32)
    h = jnp.einsum("bi,hi->bh", x, w1, precision=jax.lax.Precision.HIGHEST) + b1
    h = jnp.maximum(h, 0.0)
    return jnp.einsum("bh,ch->bc", h, w2, precision=jax.lax.Precision.HIGHEST) + b2


if __name__ == "__main__":
    key = jax.random.PRNGKey(0)
    kx1, kx2, kx3, k1, k2, k3, k4 = jax.random.split(key, 7)

    input_dim, hidden_dim, num_classes = 4, 10, 3
    # PyTorch nn.Linear parameter layouts: weight (out, in), bias (out,)
    w1 = jax.random.normal(k1, (hidden_dim, input_dim), jnp.float32) * 0.3
    b1 = jax.random.normal(k2, (hidden_dim,), jnp.float32) * 0.3
    w2 = jax.random.normal(k3, (num_classes, hidden_dim), jnp.float32) * 0.3
    b2 = jax.random.normal(k4, (num_classes,), jnp.float32) * 0.3

    # Small batch: single grid step, single strip.
    x_small = jax.random.normal(kx1, (256, input_dim), jnp.float32)
    out = jax.block_until_ready(ann_model_forward(x_small, w1, b1, w2, b2))
    assert out.shape == (256, num_classes)
    assert jnp.allclose(out, _reference(x_small, w1, b1, w2, b2), atol=2e-5, rtol=2e-5)

    # Ragged batch: exercises the pad-to-multiple-of-32 path.
    x_rag = jax.random.normal(kx2, (50, input_dim), jnp.float32)
    out = jax.block_until_ready(ann_model_forward(x_rag, w1, b1, w2, b2))
    assert out.shape == (50, num_classes)
    assert jnp.allclose(out, _reference(x_rag, w1, b1, w2, b2), atol=2e-5, rtol=2e-5)

    # Larger batch: 2 grid steps (megacore), strip-mined inner loop, partial last block.
    x_big = jax.random.normal(kx3, (40960, input_dim), jnp.float32)
    out = jax.block_until_ready(ann_model_forward(x_big, w1, b1, w2, b2))
    assert out.shape == (40960, num_classes)
    assert jnp.allclose(out, _reference(x_big, w1, b1, w2, b2), atol=2e-5, rtol=2e-5)

    print("KERNEL_OK")
</pallas_src>

<mosaic_0001>
module attributes {stable_mosaic.version = 11 : i64} {
  func.func @kernel(%arg0: i32, %arg1: memref<8x128xf32, #tpu.memory_space<vmem>>, %arg2: memref<128x320xf32, #tpu.memory_space<vmem>>, %arg3: memref<1x320xf32, #tpu.memory_space<vmem>>, %arg4: memref<320x96xf32, #tpu.memory_space<vmem>>, %arg5: memref<1x96xf32, #tpu.memory_space<vmem>>, %arg6: memref<8x96xf32, #tpu.memory_space<vmem>>) attributes {dimension_semantics = [#tpu.dimension_semantics<parallel>], iteration_bounds = array<i64: 1>, scalar_prefetch = 0 : i64, scratch_operands = 0 : i64, tpu.core_type = #tpu.core_type<tc>, window_params = [{transform_indices = @transform_0, window_bounds = array<i64: 8, 128>}, {pipeline_mode = #tpu.pipeline_mode<synchronous>, transform_indices = @transform_1, window_bounds = array<i64: 128, 320>}, {pipeline_mode = #tpu.pipeline_mode<synchronous>, transform_indices = @transform_2, window_bounds = array<i64: 1, 320>}, {pipeline_mode = #tpu.pipeline_mode<synchronous>, transform_indices = @transform_3, window_bounds = array<i64: 320, 96>}, {pipeline_mode = #tpu.pipeline_mode<synchronous>, transform_indices = @transform_4, window_bounds = array<i64: 1, 96>}, {transform_indices = @transform_5, window_bounds = array<i64: 8, 96>}]} {
    %c0 = arith.constant 0 : index
    %c0_0 = arith.constant 0 : index
    %0 = vector.load %arg1[%c0, %c0_0] : memref<8x128xf32, #tpu.memory_space<vmem>>, vector<8x128xf32>
    %c0_1 = arith.constant 0 : index
    %c0_2 = arith.constant 0 : index
    %1 = vector.load %arg2[%c0_1, %c0_2] : memref<128x320xf32, #tpu.memory_space<vmem>>, vector<128x320xf32>
    %cst = arith.constant dense<0.000000e+00> : vector<8x320xf32>
    %2 = tpu.matmul %0, %1, %cst {dimension_numbers = #tpu.dot_dimension_numbers<[1], [0], [0], [1], [0, 0, 1, 1], [], []>} : vector<8x128xf32>, vector<128x320xf32>, vector<8x320xf32> -> vector<8x320xf32>
    %c0_3 = arith.constant 0 : index
    %c0_4 = arith.constant 0 : index
    %3 = vector.load %arg3[%c0_3, %c0_4] : memref<1x320xf32, #tpu.memory_space<vmem>>, vector<1x320xf32>
    %4 = vector.broadcast %3 : vector<1x320xf32> to vector<8x320xf32>
    %5 = arith.addf %2, %4 : vector<8x320xf32>
    %cst_5 = arith.constant 0.000000e+00 : f32
    %6 = vector.broadcast %cst_5 : f32 to vector<8x320xf32>
    %7 = arith.maximumf %5, %6 : vector<8x320xf32>
    %c0_6 = arith.constant 0 : index
    %c0_7 = arith.constant 0 : index
    %8 = vector.load %arg4[%c0_6, %c0_7] : memref<320x96xf32, #tpu.memory_space<vmem>>, vector<320x96xf32>
    %cst_8 = arith.constant dense<0.000000e+00> : vector<8x96xf32>
    %9 = tpu.matmul %7, %8, %cst_8 {dimension_numbers = #tpu.dot_dimension_numbers<[1], [0], [0], [1], [0, 0, 1, 1], [], []>} : vector<8x320xf32>, vector<320x96xf32>, vector<8x96xf32> -> vector<8x96xf32>
    %c0_9 = arith.constant 0 : index
    %c0_10 = arith.constant 0 : index
    %10 = vector.load %arg5[%c0_9, %c0_10] : memref<1x96xf32, #tpu.memory_space<vmem>>, vector<1x96xf32>
    %11 = vector.broadcast %10 : vector<1x96xf32> to vector<8x96xf32>
    %12 = arith.addf %9, %11 : vector<8x96xf32>
    %c0_11 = arith.constant 0 : index
    %c0_12 = arith.constant 0 : index
    %13 = vector.load %arg6[%c0_11, %c0_12] : memref<8x96xf32, #tpu.memory_space<vmem>>, vector<8x96xf32>
    tpu.vector_store %arg6[%c0_11, %c0_12], %12 {strides = array<i32>} : memref<8x96xf32, #tpu.memory_space<vmem>>, vector<8x96xf32>,
    return
  }
  func.func @transform_0(%arg0: i32) -> (i32, i32) {
    %c0_i32 = arith.constant 0 : i32
    %c0_i32_0 = arith.constant 0 : i32
    return %arg0, %c0_i32 : i32, i32
  }
  func.func @transform_1(%arg0: i32) -> (i32, i32) {
    %c0_i32 = arith.constant 0 : i32
    %c0_i32_0 = arith.constant 0 : i32
    %c0_i32_1 = arith.constant 0 : i32
    return %c0_i32, %c0_i32_0 : i32, i32
  }
  func.func @transform_2(%arg0: i32) -> (i32, i32) {
    %c0_i32 = arith.constant 0 : i32
    %c0_i32_0 = arith.constant 0 : i32
    %c0_i32_1 = arith.constant 0 : i32
    return %c0_i32, %c0_i32_0 : i32, i32
  }
  func.func @transform_3(%arg0: i32) -> (i32, i32) {
    %c0_i32 = arith.constant 0 : i32
    %c0_i32_0 = arith.constant 0 : i32
    %c0_i32_1 = arith.constant 0 : i32
    return %c0_i32, %c0_i32_0 : i32, i32
  }
  func.func @transform_4(%arg0: i32) -> (i32, i32) {
    %c0_i32 = arith.constant 0 : i32
    %c0_i32_0 = arith.constant 0 : i32
    %c0_i32_1 = arith.constant 0 : i32
    return %c0_i32, %c0_i32_0 : i32, i32
  }
  func.func @transform_5(%arg0: i32) -> (i32, i32) {
    %c0_i32 = arith.constant 0 : i32
    %c0_i32_0 = arith.constant 0 : i32
    return %arg0, %c0_i32 : i32, i32
  }
}

</mosaic_0001>

<llo_original>
// kernel: tpu_custom_call.1
$region0: #{tpu_custom_call.1}
  #allocation0 [shape = 'u32[]', space=smem, size = 0x4, offset = 0x4, fixed_abs, tag = 'smem constant byte address 0x4 - core index']
  #allocation1 [shape = 'u32[144,128]{1,0:T(1,128)}', space=vmem, size = 0x12000, scoped, tag = 'internal scratch']
  %s0 = inlined_call_operand.vmem [shape: f32[8,128], index: 0, kind: input, shape index: {}]
  %s1 = inlined_call_operand.vmem [shape: f32[128,320], index: 1, kind: input, shape index: {}]
  %s2 = inlined_call_operand.vmem [shape: f32[1,320], index: 2, kind: input, shape index: {}]
  %s3 = inlined_call_operand.vmem [shape: f32[320,96], index: 3, kind: input, shape index: {}]
  %s4 = inlined_call_operand.vmem [shape: f32[1,96], index: 4, kind: input, shape index: {}]
  %s5 = inlined_call_operand.hbm [shape: f32[8,96], index: 5, kind: output, shape index: {}]
  %s6 = sld [smem:[#allocation0]]
  $region30: #{tpu_custom_call.1} parent=0
    _
  %s8 = ssub.s32 1, %s6
  %s9 = scalar_select 0, %s8, %s6
  $region1: #{tpu_custom_call.1} parent=0
    #allocation2 [shape = 'u8[4096]{0}', space=vmem, size = 0x1000, scoped, tag = 'output window, operand 0, single buffered']
    #allocation3 [shape = 's32[1]{0}', space=sflag, size = 0x4, scoped, tag = 'scoped memory for tpu_custom_call.1']
    %10 = vsyncpa [#allocation3], 0
    // Predicated region
    $region2: #{tpu_custom_call.1} parent=1 // pred_check
      _
    $region3: #{tpu_custom_call.1} parent=1 // pred_check_branch
      %12 = sbr.rel (0) target = $region5
    $region4: #{tpu_custom_call.1} parent=1 // pred_region
      _
    $region5: #{tpu_custom_call.1} parent=1 // pred_fallthru
      _
    // Predicated region
    $region6: #{tpu_custom_call.1} parent=1 // pred_check
      _
    $region7: #{tpu_custom_call.1} parent=1 // pred_check_branch
      %14 = sbr.rel (0) target = $region9
    $region8: #{tpu_custom_call.1} parent=1 // pred_region
      _
    $region9: #{tpu_custom_call.1} parent=1 // pred_fallthru
      _
    // Predicated region
    $region10: #{tpu_custom_call.1} parent=1 // pred_check
      _
    $region11: #{tpu_custom_call.1} parent=1 // pred_check_branch
      %16 = sbr.rel (0) target = $region13
    $region12: #{tpu_custom_call.1} parent=1 // pred_region
      _
    $region13: #{tpu_custom_call.1} parent=1 // pred_fallthru
      _
    // Predicated region
    $region14: #{tpu_custom_call.1} parent=1 // pred_check
      _
    $region15: #{tpu_custom_call.1} parent=1 // pred_check_branch
      %18 = sbr.rel (0) target = $region17
    $region16: #{tpu_custom_call.1} parent=1 // pred_region
      _
    $region17: #{tpu_custom_call.1} parent=1 // pred_fallthru
      _
    // Predicated region
    $region18: #{tpu_custom_call.1} parent=1 // pred_check
      _
    $region19: #{tpu_custom_call.1} parent=1 // pred_check_branch
      %20 = sbr.rel (0) target = $region21
    $region20: #{tpu_custom_call.1} parent=1 // pred_region
      _
    $region21: #{tpu_custom_call.1} parent=1 // pred_fallthru
      _
    %v21 = vld [vmem:[%s0] sm:$0xff]
    %v22 = vld [vmem:[%s1] sm:$0xff]
    %v23 = vld [vmem:[%s1 + $0x8] sm:$0xff]
    %v24 = vld [vmem:[%s1 + $0x10] sm:$0xff]
    %v25 = vld [vmem:[%s1 + $0x18] sm:$0xff]
    %v26 = vld [vmem:[%s1 + $0x20] sm:$0xff]
    %v27 = vld [vmem:[%s1 + $0x28] sm:$0xff]
    %v28 = vld [vmem:[%s1 + $0x30] sm:$0xff]
    %v29 = vld [vmem:[%s1 + $0x38] sm:$0xff]
    %v30 = vld [vmem:[%s1 + $0x40] sm:$0xff]
    %v31 = vld [vmem:[%s1 + $0x48] sm:$0xff]
    %v32 = vld [vmem:[%s1 + $0x50] sm:$0xff]
    %v33 = vld [vmem:[%s1 + $0x58] sm:$0xff]
    %v34 = vld [vmem:[%s1 + $0x60] sm:$0xff]
    %v35 = vld [vmem:[%s1 + $0x68] sm:$0xff]
    %v36 = vld [vmem:[%s1 + $0x70] sm:$0xff]
    %v37 = vld [vmem:[%s1 + $0x78] sm:$0xff]
    %v38 = vld [vmem:[%s1 + $0x80] sm:$0xff]
    %v39 = vld [vmem:[%s1 + $0x88] sm:$0xff]
    %v40 = vld [vmem:[%s1 + $0x90] sm:$0xff]
    %v41 = vld [vmem:[%s1 + $0x98] sm:$0xff]
    %v42 = vld [vmem:[%s1 + $0xa0] sm:$0xff]
    %v43 = vld [vmem:[%s1 + $0xa8] sm:$0xff]
    %v44 = vld [vmem:[%s1 + $0xb0] sm:$0xff]
    %v45 = vld [vmem:[%s1 + $0xb8] sm:$0xff]
    %v46 = vld [vmem:[%s1 + $0xc0] sm:$0xff]
    %v47 = vld [vmem:[%s1 + $0xc8] sm:$0xff]
    %v48 = vld [vmem:[%s1 + $0xd0] sm:$0xff]
    %v49 = vld [vmem:[%s1 + $0xd8] sm:$0xff]
    %v50 = vld [vmem:[%s1 + $0xe0] sm:$0xff]
    %v51 = vld [vmem:[%s1 + $0xe8] sm:$0xff]
    %v52 = vld [vmem:[%s1 + $0xf0] sm:$0xff]
    %v53 = vld [vmem:[%s1 + $0xf8] sm:$0xff]
    %v54 = vld [vmem:[%s1 + $0x100] sm:$0xff]
    %v55 = vld [vmem:[%s1 + $0x108] sm:$0xff]
    %v56 = vld [vmem:[%s1 + $0x110] sm:$0xff]
    %v57 = vld [vmem:[%s1 + $0x118] sm:$0xff]
    %v58 = vld [vmem:[%s1 + $0x120] sm:$0xff]
    %v59 = vld [vmem:[%s1 + $0x128] sm:$0xff]
    %v60 = vld [vmem:[%s1 + $0x130] sm:$0xff]
    %v61 = vld [vmem:[%s1 + $0x138] sm:$0xff]
    %v62 = vld [vmem:[%s1 + $0x140] sm:$0xff]
    %v63 = vld [vmem:[%s1 + $0x148] sm:$0xff]
    %v64 = vld [vmem:[%s1 + $0x150] sm:$0xff]
    %v65 = vld [vmem:[%s1 + $0x158] sm:$0xff]
    %v66 = vld [vmem:[%s1 + $0x160] sm:$0xff]
    %v67 = vld [vmem:[%s1 + $0x168] sm:$0xff]
    %v68 = vld [vmem:[%s1 + $0x170] sm:$0xff]
    %v69 = vld [vmem:[%s1 + $0x178] sm:$0xff]
    %v70 = vld [vmem:[%s2] sm:$0x7]
    %v72 = vlaneseq
    %v73 = vshrl.u32 %v72, 7
    %v74 = vsub.s32 0, %v73
    %v75 = vrot.slane %v70, %v74
    %v76 = vlaneseq
    %v77 = vshrl.u32 %v76, 7
    %v78 = vsub.s32 1, %v77
    %v79 = vrot.slane %v70, %v78
    %v80 = vlaneseq
    %v81 = vshrl.u32 %v80, 7
    %v82 = vsub.s32 2, %v81
    %v83 = vrot.slane %v70, %v82
    %87 = vmatprep.subr.mxu0 %v68
    %88 = vmatpush1.msra.mxu0 %v67
    %89 = vmatprep.subr.mxu0 %v65
    %90 = vmatpush1.msra.mxu0 %v64
    %91 = vmatprep.subr.mxu0 %v62
    %92 = vmatpush1.msra.mxu0 %v61
    %93 = vmatprep.subr.mxu0 %v59
    %94 = vmatpush1.msra.mxu0 %v58
    %95 = vmatprep.subr.mxu0 %v56
    %96 = vmatpush1.msra.mxu0 %v55
    %97 = vmatprep.subr.mxu0 %v53
    %98 = vmatpush1.msra.mxu0 %v52
    %99 = vmatprep.subr.mxu0 %v50
    %100 = vmatpush1.msra.mxu0 %v49
    %101 = vmatprep.subr.mxu0 %v47
    %102 = vmatpush1.msra.mxu0 %v46
    %103 = vmatprep.subr.mxu0 %v44
    %104 = vmatpush1.msra.mxu0 %v43
    %105 = vmatprep.subr.mxu0 %v41
    %106 = vmatpush1.msra.mxu0 %v40
    %107 = vmatprep.subr.mxu0 %v38
    %108 = vmatpush1.msra.mxu0 %v37
    %109 = vmatprep.subr.mxu0 %v35
    %110 = vmatpush1.msra.mxu0 %v34
    %111 = vmatprep.subr.mxu0 %v32
    %112 = vmatpush1.msra.mxu0 %v31
    %113 = vmatprep.subr.mxu0 %v29
    %114 = vmatpush1.msra.mxu0 %v28
    %115 = vmatprep.subr.mxu0 %v26
    %116 = vmatpush1.msra.mxu0 %v25
    %117 = vmatprep.subr.mxu0 %v23
    %118 = vmatpush1.msra.mxu0 %v22
    %119 = vmatprep.subr.mxu0 0.0
    %120 = vmatpush2.msra.mxu0 0.0
    %121 = vmatprep.subr.mxu0 0.0
    %122 = vmatpush2.msra.mxu0 0.0
    %123 = vmatprep.subr.mxu0 0.0
    %124 = vmatpush2.msra.mxu0 0.0
    %125 = vmatprep.subr.mxu0 0.0
    %126 = vmatpush2.msra.mxu0 0.0
    %127 = vmatprep.subr.mxu0 0.0
    %128 = vmatpush2.msra.mxu0 0.0
    %129 = vmatprep.subr.mxu0 0.0
    %130 = vmatpush2.msra.mxu0 0.0
    %131 = vmatprep.subr.mxu0 0.0
    %132 = vmatpush2.msra.mxu0 0.0
    %133 = vmatprep.subr.mxu0 0.0
    %134 = vmatpush2.msra.mxu0 0.0
    %135 = vmatprep.subr.mxu0 0.0
    %136 = vmatpush2.msra.mxu0 0.0
    %137 = vmatprep.subr.mxu0 0.0
    %138 = vmatpush2.msra.mxu0 0.0
    %139 = vmatprep.subr.mxu0 0.0
    %140 = vmatpush2.msra.mxu0 0.0
    %141 = vmatprep.subr.mxu0 0.0
    %142 = vmatpush2.msra.mxu0 0.0
    %143 = vmatprep.subr.mxu0 0.0
    %144 = vmatpush2.msra.mxu0 0.0
    %145 = vmatprep.subr.mxu0 0.0
    %146 = vmatpush2.msra.mxu0 0.0
    %147 = vmatprep.subr.mxu0 0.0
    %148 = vmatpush2.msra.mxu0 0.0
    %149 = vmatprep.subr.mxu0 0.0
    %150 = vmatpush2.msra.mxu0 0.0
    %151 = vmatprep.mubr.f32.mxu0 0.0
    %152 = vmatmul.mubr.f32.gmra.mxu0 %v21
    %v153 = vpop.f32.mrf.mxu0
    %v154 = vadd.f32 %v75, %v153
    %v155 = vpop.f32.mrf.mxu0
    %v156 = vadd.f32 %v79, %v155
    %157 = vdwg.mxu0
    %158 = vmatprep.subr.mxu0 0.0
    %159 = vmatpush1.msra.mxu0 %v69
    %160 = vmatprep.subr.mxu0 0.0
    %161 = vmatpush1.msra.mxu0 %v66
    %162 = vmatprep.subr.mxu0 0.0
    %163 = vmatpush1.msra.mxu0 %v63
    %164 = vmatprep.subr.mxu0 0.0
    %165 = vmatpush1.msra.mxu0 %v60
    %166 = vmatprep.subr.mxu0 0.0
    %167 = vmatpush1.msra.mxu0 %v57
    %168 = vmatprep.subr.mxu0 0.0
    %169 = vmatpush1.msra.mxu0 %v54
    %170 = vmatprep.subr.mxu0 0.0
    %171 = vmatpush1.msra.mxu0 %v51
    %172 = vmatprep.subr.mxu0 0.0
    %173 = vmatpush1.msra.mxu0 %v48
    %174 = vmatprep.subr.mxu0 0.0
    %175 = vmatpush1.msra.mxu0 %v45
    %176 = vmatprep.subr.mxu0 0.0
    %177 = vmatpush1.msra.mxu0 %v42
    %178 = vmatprep.subr.mxu0 0.0
    %179 = vmatpush1.msra.mxu0 %v39
    %180 = vmatprep.subr.mxu0 0.0
    %181 = vmatpush1.msra.mxu0 %v36
    %182 = vmatprep.subr.mxu0 0.0
    %183 = vmatpush1.msra.mxu0 %v33
    %184 = vmatprep.subr.mxu0 0.0
    %185 = vmatpush1.msra.mxu0 %v30
    %186 = vmatprep.subr.mxu0 0.0
    %187 = vmatpush1.msra.mxu0 %v27
    %188 = vmatprep.subr.mxu0 0.0
    %189 = vmatpush1.msra.mxu0 %v24
    %190 = vmatprep.subr.mxu0 0.0
    %191 = vmatpush2.msra.mxu0 0.0
    %192 = vmatprep.subr.mxu0 0.0
    %193 = vmatpush2.msra.mxu0 0.0
    %194 = vmatprep.subr.mxu0 0.0
    %195 = vmatpush2.msra.mxu0 0.0
    %196 = vmatprep.subr.mxu0 0.0
    %197 = vmatpush2.msra.mxu0 0.0
    %198 = vmatprep.subr.mxu0 0.0
    %199 = vmatpush2.msra.mxu0 0.0
    %200 = vmatprep.subr.mxu0 0.0
    %201 = vmatpush2.msra.mxu0 0.0
    %202 = vmatprep.subr.mxu0 0.0
    %203 = vmatpush2.msra.mxu0 0.0
    %204 = vmatprep.subr.mxu0 0.0
    %205 = vmatpush2.msra.mxu0 0.0
    %206 = vmatprep.subr.mxu0 0.0
    %207 = vmatpush2.msra.mxu0 0.0
    %208 = vmatprep.subr.mxu0 0.0
    %209 = vmatpush2.msra.mxu0 0.0
    %210 = vmatprep.subr.mxu0 0.0
    %211 = vmatpush2.msra.mxu0 0.0
    %212 = vmatprep.subr.mxu0 0.0
    %213 = vmatpush2.msra.mxu0 0.0
    %214 = vmatprep.subr.mxu0 0.0
    %215 = vmatpush2.msra.mxu0 0.0
    %216 = vmatprep.subr.mxu0 0.0
    %217 = vmatpush2.msra.mxu0 0.0
    %218 = vmatprep.subr.mxu0 0.0
    %219 = vmatpush2.msra.mxu0 0.0
    %220 = vmatprep.subr.mxu0 0.0
    %221 = vmatpush2.msra.mxu0 0.0
    %222 = vmatprep.mubr.f32.mxu0 0.0
    %223 = vmatmul.mubr.f32.gmra.mxu0 %v21
    %v224 = vpop.f32.mrf.mxu0
    %v225 = vadd.f32 %v83, %v224
    %v226 = vpop.f32.mrf.mxu0
    %227 = vdwg.mxu0
    %v228 = vmax.f32 %v154, 0.0
    %v229 = vmax.f32 %v156, 0.0
    %v230 = vmax.f32 %v225, 0.0
    %v231 = vld [vmem:[%s3] sm:$0xff]
    %v232 = vld [vmem:[%s3 + $0x8] sm:$0xff]
    %v233 = vld [vmem:[%s3 + $0x10] sm:$0xff]
    %v234 = vld [vmem:[%s3 + $0x18] sm:$0xff]
    %v235 = vld [vmem:[%s3 + $0x20] sm:$0xff]
    %v236 = vld [vmem:[%s3 + $0x28] sm:$0xff]
    %v237 = vld [vmem:[%s3 + $0x30] sm:$0xff]
    %v238 = vld [vmem:[%s3 + $0x38] sm:$0xff]
    %v239 = vld [vmem:[%s3 + $0x40] sm:$0xff]
    %v240 = vld [vmem:[%s3 + $0x48] sm:$0xff]
    %v241 = vld [vmem:[%s3 + $0x50] sm:$0xff]
    %v242 = vld [vmem:[%s3 + $0x58] sm:$0xff]
    %v243 = vld [vmem:[%s3 + $0x60] sm:$0xff]
    %v244 = vld [vmem:[%s3 + $0x68] sm:$0xff]
    %v245 = vld [vmem:[%s3 + $0x70] sm:$0xff]
    %v246 = vld [vmem:[%s3 + $0x78] sm:$0xff]
    %v247 = vld [vmem:[%s3 + $0x80] sm:$0xff]
    %v248 = vld [vmem:[%s3 + $0x88] sm:$0xff]
    %v249 = vld [vmem:[%s3 + $0x90] sm:$0xff]
    %v250 = vld [vmem:[%s3 + $0x98] sm:$0xff]
    %v251 = vld [vmem:[%s3 + $0xa0] sm:$0xff]
    %v252 = vld [vmem:[%s3 + $0xa8] sm:$0xff]
    %v253 = vld [vmem:[%s3 + $0xb0] sm:$0xff]
    %v254 = vld [vmem:[%s3 + $0xb8] sm:$0xff]
    %v255 = vld [vmem:[%s3 + $0xc0] sm:$0xff]
    %v256 = vld [vmem:[%s3 + $0xc8] sm:$0xff]
    %v257 = vld [vmem:[%s3 + $0xd0] sm:$0xff]
    %v258 = vld [vmem:[%s3 + $0xd8] sm:$0xff]
    %v259 = vld [vmem:[%s3 + $0xe0] sm:$0xff]
    %v260 = vld [vmem:[%s3 + $0xe8] sm:$0xff]
    %v261 = vld [vmem:[%s3 + $0xf0] sm:$0xff]
    %v262 = vld [vmem:[%s3 + $0xf8] sm:$0xff]
    %v263 = vld [vmem:[%s3 + $0x100] sm:$0xff]
    %v264 = vld [vmem:[%s3 + $0x108] sm:$0xff]
    %v265 = vld [vmem:[%s3 + $0x110] sm:$0xff]
    %v266 = vld [vmem:[%s3 + $0x118] sm:$0xff]
    %v267 = vld [vmem:[%s3 + $0x120] sm:$0xff]
    %v268 = vld [vmem:[%s3 + $0x128] sm:$0xff]
    %v269 = vld [vmem:[%s3 + $0x130] sm:$0xff]
    %v270 = vld [vmem:[%s3 + $0x138] sm:$0xff]
    %v271 = vld [vmem:[%s4] sm:$0x1]
    %v273 = vlaneseq
    %v274 = vshrl.u32 %v273, 7
    %v275 = vsub.s32 0, %v274
    %v276 = vrot.slane %v271, %v275
    %vm278 = vcmask 523264
    %v280 = vsel %vm278, %v230, 0
    %282 = vmatprep.subr.mxu0 0.0
    %283 = vmatpush1.msra.mxu0 %v246
    %284 = vmatprep.subr.mxu0 0.0
    %285 = vmatpush1.msra.mxu0 %v245
    %286 = vmatprep.subr.mxu0 0.0
    %287 = vmatpush1.msra.mxu0 %v244
    %288 = vmatprep.subr.mxu0 0.0
    %289 = vmatpush1.msra.mxu0 %v243
    %290 = vmatprep.subr.mxu0 0.0
    %291 = vmatpush1.msra.mxu0 %v242
    %292 = vmatprep.subr.mxu0 0.0
    %293 = vmatpush1.msra.mxu0 %v241
    %294 = vmatprep.subr.mxu0 0.0
    %295 = vmatpush1.msra.mxu0 %v240
    %296 = vmatprep.subr.mxu0 0.0
    %297 = vmatpush1.msra.mxu0 %v239
    %298 = vmatprep.subr.mxu0 0.0
    %299 = vmatpush1.msra.mxu0 %v238
    %300 = vmatprep.subr.mxu0 0.0
    %301 = vmatpush1.msra.mxu0 %v237
    %302 = vmatprep.subr.mxu0 0.0
    %303 = vmatpush1.msra.mxu0 %v236
    %304 = vmatprep.subr.mxu0 0.0
    %305 = vmatpush1.msra.mxu0 %v235
    %306 = vmatprep.subr.mxu0 0.0
    %307 = vmatpush1.msra.mxu0 %v234
    %308 = vmatprep.subr.mxu0 0.0
    %309 = vmatpush1.msra.mxu0 %v233
    %310 = vmatprep.subr.mxu0 0.0
    %311 = vmatpush1.msra.mxu0 %v232
    %312 = vmatprep.subr.mxu0 0.0
    %313 = vmatpush1.msra.mxu0 %v231
    %314 = vmatprep.subr.mxu0 0.0
    %315 = vmatpush2.msra.mxu0 %v262
    %316 = vmatprep.subr.mxu0 0.0
    %317 = vmatpush2.msra.mxu0 %v261
    %318 = vmatprep.subr.mxu0 0.0
    %319 = vmatpush2.msra.mxu0 %v260
    %320 = vmatprep.subr.mxu0 0.0
    %321 = vmatpush2.msra.mxu0 %v259
    %322 = vmatprep.subr.mxu0 0.0
    %323 = vmatpush2.msra.mxu0 %v258
    %324 = vmatprep.subr.mxu0 0.0
    %325 = vmatpush2.msra.mxu0 %v257
    %326 = vmatprep.subr.mxu0 0.0
    %327 = vmatpush2.msra.mxu0 %v256
    %328 = vmatprep.subr.mxu0 0.0
    %329 = vmatpush2.msra.mxu0 %v255
    %330 = vmatprep.subr.mxu0 0.0
    %331 = vmatpush2.msra.mxu0 %v254
    %332 = vmatprep.subr.mxu0 0.0
    %333 = vmatpush2.msra.mxu0 %v253
    %334 = vmatprep.subr.mxu0 0.0
    %335 = vmatpush2.msra.mxu0 %v252
    %336 = vmatprep.subr.mxu0 0.0
    %337 = vmatpush2.msra.mxu0 %v251
    %338 = vmatprep.subr.mxu0 0.0
    %339 = vmatpush2.msra.mxu0 %v250
    %340 = vmatprep.subr.mxu0 0.0
    %341 = vmatpush2.msra.mxu0 %v249
    %342 = vmatprep.subr.mxu0 0.0
    %343 = vmatpush2.msra.mxu0 %v248
    %344 = vmatprep.subr.mxu0 0.0
    %345 = vmatpush2.msra.mxu0 %v247
    %346 = vmatprep.mubr.f32.mxu0 %v229
    %347 = vmatmul.mubr.f32.gmra.mxu0 %v228
    %v348 = vpop.f32.mrf.mxu0
    %v349 = vadd.f32 %v276, %v348
    %v350 = vpop.f32.mrf.mxu0
    %351 = vdwg.mxu0
    %352 = vmatprep.subr.mxu0 0.0
    %353 = vmatpush1.msra.mxu0 0.0
    %354 = vmatprep.subr.mxu0 0.0
    %355 = vmatpush1.msra.mxu0 0.0
    %356 = vmatprep.subr.mxu0 0.0
    %357 = vmatpush1.msra.mxu0 0.0
    %358 = vmatprep.subr.mxu0 0.0
    %359 = vmatpush1.msra.mxu0 0.0
    %360 = vmatprep.subr.mxu0 0.0
    %361 = vmatpush1.msra.mxu0 0.0
    %362 = vmatprep.subr.mxu0 0.0
    %363 = vmatpush1.msra.mxu0 0.0
    %364 = vmatprep.subr.mxu0 0.0
    %365 = vmatpush1.msra.mxu0 0.0
    %366 = vmatprep.subr.mxu0 0.0
    %367 = vmatpush1.msra.mxu0 0.0
    %368 = vmatprep.subr.mxu0 0.0
    %369 = vmatpush1.msra.mxu0 %v270
    %370 = vmatprep.subr.mxu0 0.0
    %371 = vmatpush1.msra.mxu0 %v269
    %372 = vmatprep.subr.mxu0 0.0
    %373 = vmatpush1.msra.mxu0 %v268
    %374 = vmatprep.subr.mxu0 0.0
    %375 = vmatpush1.msra.mxu0 %v267
    %376 = vmatprep.subr.mxu0 0.0
    %377 = vmatpush1.msra.mxu0 %v266
    %378 = vmatprep.subr.mxu0 0.0
    %379 = vmatpush1.msra.mxu0 %v265
    %380 = vmatprep.subr.mxu0 0.0
    %381 = vmatpush1.msra.mxu0 %v264
    %382 = vmatprep.subr.mxu0 0.0
    %383 = vmatpush1.msra.mxu0 %v263
    %384 = vmatprep.subr.mxu0 0.0
    %385 = vmatpush2.msra.mxu0 0.0
    %386 = vmatprep.subr.mxu0 0.0
    %387 = vmatpush2.msra.mxu0 0.0
    %388 = vmatprep.subr.mxu0 0.0
    %389 = vmatpush2.msra.mxu0 0.0
    %390 = vmatprep.subr.mxu0 0.0
    %391 = vmatpush2.msra.mxu0 0.0
    %392 = vmatprep.subr.mxu0 0.0
    %393 = vmatpush2.msra.mxu0 0.0
    %394 = vmatprep.subr.mxu0 0.0
    %395 = vmatpush2.msra.mxu0 0.0
    %396 = vmatprep.subr.mxu0 0.0
    %397 = vmatpush2.msra.mxu0 0.0
    %398 = vmatprep.subr.mxu0 0.0
    %399 = vmatpush2.msra.mxu0 0.0
    %400 = vmatprep.subr.mxu0 0.0
    %401 = vmatpush2.msra.mxu0 0.0
    %402 = vmatprep.subr.mxu0 0.0
    %403 = vmatpush2.msra.mxu0 0.0
    %404 = vmatprep.subr.mxu0 0.0
    %405 = vmatpush2.msra.mxu0 0.0
    %406 = vmatprep.subr.mxu0 0.0
    %407 = vmatpush2.msra.mxu0 0.0
    %408 = vmatprep.subr.mxu0 0.0
    %409 = vmatpush2.msra.mxu0 0.0
    %410 = vmatprep.subr.mxu0 0.0
    %411 = vmatpush2.msra.mxu0 0.0
    %412 = vmatprep.subr.mxu0 0.0
    %413 = vmatpush2.msra.mxu0 0.0
    %414 = vmatprep.subr.mxu0 0.0
    %415 = vmatpush2.msra.mxu0 0.0
    %416 = vmatprep.mubr.f32.mxu0 0.0
    %417 = vmatmul.mubr.f32.gmra.mxu0 %v280
    %v418 = vpop.f32.mrf.mxu0
    %v419 = vadd.f32 %v349, %v418
    %v420 = vpop.f32.mrf.mxu0
    %421 = vdwg.mxu0
    %vm422 = vcmask 785408
    %423 = vst.msk [vmem:[#allocation2] sm:$0xff] %vm422, %v419
    // Predicated region
    $region22: #{tpu_custom_call.1} parent=1 // pred_check
      _
    $region23: #{tpu_custom_call.1} parent=1 // pred_check_branch
      %425 = sbr.rel (0) target = $region25
    $region24: #{tpu_custom_call.1} parent=1 // pred_region
      %s427 = ssub.s32 128, 128
      %428 = vsyncadd [#allocation3], %s427
      %s430 = sshll.u32 [#allocation2], 4
      %s431 = int_to_ptr.vmem [resolvable:$true] %s430
      %433 = dma.vmem_to_hbm [thread:$0]  %s431, 128, %s5, [#allocation3]
    $region25: #{tpu_custom_call.1} parent=1 // pred_fallthru
      _
    // Predicated region
    $region26: #{tpu_custom_call.1} parent=1 // pred_check
      _
    $region27: #{tpu_custom_call.1} parent=1 // pred_check_branch
      %435 = sbr.rel (0) target = $region29
    $region28: #{tpu_custom_call.1} parent=1 // pred_region
      %436 = dma.done [#allocation3], 128
    $region29: #{tpu_custom_call.1} parent=1 // pred_fallthru
      _
    %437 = vsyncpa [#allocation3], 1

</llo_original>
